<compile_context>
chip_gen: v7x
topology: tpu7x:2x2x1
jax: 0.10.0
libtpu: 0.0.40
codegen_flags: <defaults>
</compile_context>

<pallas_src>
import jax
import jax.numpy as jnp
from jax.experimental import pallas as pl
from jax.experimental.pallas import tpu as pltpu

OBS_SIZE = 21
OBS_WIDTH = 2
CONV_NUMBER = 6
HIDDEN = 256
KH = OBS_WIDTH * 2                     # conv kernel height = 4
IN_FLAT = KH * OBS_SIZE                # 84   (flattened (1, 4, 21) input)
CONV_FLAT = CONV_NUMBER * OBS_SIZE     # 126  (== self.input_size)
N_OUT = 3

CONV_PAD = 128                         # 126 -> 128 (lane-aligned conv/layer-1 width)
HEAD_PAD = 128                         # 3   -> 128 (lane-dense output head)
N_BIAS_ROWS = 8                        # 6 used rows, padded to a full sublane tile
TB_DEFAULT = 2048                      # batch tile (sweepable; multiple of 16)


def _convnet_kernel(x_ref, mconv_ref, w1_ref, wh_ref, wt_ref, bias_ref, out_ref):
    f32 = jnp.float32
    bf16 = jnp.bfloat16

    # f32 -> bf16 cast inside the kernel (cheap VPU op, hidden under the MXU).
    x = x_ref[...].astype(bf16)                                       # (TB, 84)

    # Conv2d folded into a dense matmul -> 128-wide (126 real lanes), then ReLU.
    h = jnp.dot(x, mconv_ref[...], preferred_element_type=f32)        # (TB, 128)
    h = jnp.maximum(h + bias_ref[0:1, :CONV_PAD], 0.0)

    # Layer 1: 128 -> 256 (padded conv lanes hit zero weight rows).
    h = jnp.dot(h.astype(bf16), w1_ref[...], preferred_element_type=f32)
    h = jnp.maximum(h + bias_ref[1:2, :], 0.0)                        # (TB, 256)

    # Layers 2-4: 256 -> 256, bf16 operands, f32 accumulation/elementwise.
    for i in range(3):
        h = jnp.dot(h.astype(bf16), wh_ref[i], preferred_element_type=f32)
        h = jnp.maximum(h + bias_ref[i + 2:i + 3, :], 0.0)            # (TB, 256)

    # Throttle head, lane-dense (128 columns; only the first 3 are real).
    # Padded-lane masking lives in the bias row (-1e30), so exp() underflows to 0.
    logits = jnp.dot(h.astype(bf16), wt_ref[...], preferred_element_type=f32)
    logits = logits + bias_ref[5:6, :HEAD_PAD]                        # (TB, 128)

    m = jnp.max(logits, axis=1, keepdims=True)
    z = logits - m
    lse = jnp.log(jnp.sum(jnp.exp(z), axis=1, keepdims=True))
    out_ref[...] = (z - lse).astype(out_ref.dtype)                    # (TB, 128)


def _round_up(n, m):
    return ((n + m - 1) // m) * m


def convnet_forward(seq, params, *, tb_max=TB_DEFAULT, out_dtype=jnp.float32):
    """seq: (..., 4, 21) float32 -> log_softmax logits of shape (B, 3)."""
    x = seq.reshape(-1, IN_FLAT).astype(jnp.float32)   # NCHW view flattened (C=1)
    B = x.shape[0]

    # Adaptive batch tile: multiple of 16 (bf16 sublane packing), capped at
    # tb_max; split so the 'parallel' grid has >=2 steps when the batch allows
    # it (keeps both v7x TensorCores busy, harmless on single-TC chips).
    tb = min(tb_max, _round_up(B, 16))
    if B <= tb and B >= 32:
        tb = _round_up(-(-B // 2), 16)
    b_pad = _round_up(B, tb)
    if b_pad != B:
        x = jnp.pad(x, ((0, b_pad - B), (0, 0)))       # only when padding is needed

    grid = (b_pad // tb,)
    out = pl.pallas_call(
        _convnet_kernel,
        out_shape=jax.ShapeDtypeStruct((b_pad, HEAD_PAD), out_dtype),
        grid=grid,
        in_specs=[
            pl.BlockSpec((tb, IN_FLAT), lambda i: (i, 0)),             # activations (f32)
            pl.BlockSpec((IN_FLAT, CONV_PAD), lambda i: (0, 0)),       # folded conv
            pl.BlockSpec((CONV_PAD, HIDDEN), lambda i: (0, 0)),        # layer-1 weight
            pl.BlockSpec((3, HIDDEN, HIDDEN), lambda i: (0, 0, 0)),    # layers 2-4
            pl.BlockSpec((HIDDEN, HEAD_PAD), lambda i: (0, 0)),        # throttle head
            pl.BlockSpec((N_BIAS_ROWS, HIDDEN), lambda i: (0, 0)),     # bias slab
        ],
        out_specs=pl.BlockSpec((tb, HEAD_PAD), lambda i: (i, 0)),
        compiler_params=pltpu.CompilerParams(
            dimension_semantics=("parallel",),
            vmem_limit_bytes=32 * 1024 * 1024),
    )(x, params["m_conv"], params["w1"], params["w_hidden"],
      params["wt"], params["bias"])
    return out[:B, :N_OUT]


def init_raw_params(key):
    """Deterministic PyTorch-style (uniform +-1/sqrt(fan_in)) initialization."""
    ks = jax.random.split(key, 12)

    def u(k, fan_in, shape):
        bound = 1.0 / float(fan_in) ** 0.5
        return jax.random.uniform(k, shape, jnp.float32, -bound, bound)

    raw = {}
    raw["w_conv"] = u(ks[0], 1 * KH * 1, (CONV_NUMBER, 1, KH, 1))   # (6,1,4,1)
    raw["b_conv"] = u(ks[1], 1 * KH * 1, (CONV_NUMBER,))
    raw["w1"] = u(ks[2], CONV_FLAT, (CONV_FLAT, HIDDEN))            # stored (in, out)
    raw["b1"] = u(ks[3], CONV_FLAT, (HIDDEN,))
    raw["w2"] = u(ks[4], HIDDEN, (HIDDEN, HIDDEN))
    raw["b2"] = u(ks[5], HIDDEN, (HIDDEN,))
    raw["w3"] = u(ks[6], HIDDEN, (HIDDEN, HIDDEN))
    raw["b3"] = u(ks[7], HIDDEN, (HIDDEN,))
    raw["w4"] = u(ks[8], HIDDEN, (HIDDEN, HIDDEN))
    raw["b4"] = u(ks[9], HIDDEN, (HIDDEN,))
    raw["wt"] = u(ks[10], HIDDEN, (HIDDEN, N_OUT))
    raw["bt"] = u(ks[11], HIDDEN, (N_OUT,))
    return raw


def pack_kernel_params(raw):
    """Fold conv into a 128-wide dense matrix, pad/stack weights (bf16), slab biases (f32)."""
    f32 = jnp.float32

    # Conv2d(1,6,(4,1)) -> dense M[h*21+w, c*21+v] = W[c,h] * (w == v)
    # (channel-major output, matching PyTorch's x.view(-1, 126)); padded to 128 lanes.
    w_hc = raw["w_conv"][:, 0, :, 0].T                       # (4, 6): W[c,h] transposed to [h,c]
    eye_w = jnp.eye(OBS_SIZE, dtype=f32)                     # (21, 21)
    m_conv = (w_hc[:, None, :, None] * eye_w[None, :, None, :]).reshape(IN_FLAT, CONV_FLAT)
    m_conv_p = jnp.zeros((IN_FLAT, CONV_PAD), f32).at[:, :CONV_FLAT].set(m_conv)

    # Layer-1 weight: (126, 256) -> (128, 256); padded conv lanes map to zero rows.
    w1_p = jnp.zeros((CONV_PAD, HIDDEN), f32).at[:CONV_FLAT, :].set(raw["w1"])

    # Layers 2-4 stacked: (3, 256, 256).
    w_hidden = jnp.stack([raw["w2"], raw["w3"], raw["w4"]], axis=0)

    # Throttle head padded to a lane-dense 128-wide output.
    wt_p = jnp.zeros((HIDDEN, HEAD_PAD), f32).at[:, :N_OUT].set(raw["wt"])

    # Consolidated f32 bias slab:
    #   row 0   : conv bias (channel-major repeat) over the first 126 of 128 lanes
    #   rows 1-4: hidden-layer biases
    #   row 5   : throttle bias; padded lanes 3..127 set to -1e30 so exp()
    #             underflows to exactly 0 inside the in-kernel log_softmax.
    b_conv_row = jnp.zeros((HIDDEN,), f32).at[:CONV_FLAT].set(
        jnp.repeat(raw["b_conv"], OBS_SIZE))
    bt_row = jnp.zeros((HIDDEN,), f32).at[N_OUT:HEAD_PAD].set(-1e30)
    bt_row = bt_row.at[:N_OUT].set(raw["bt"])

    bias = jnp.zeros((N_BIAS_ROWS, HIDDEN), f32)
    bias = bias.at[0].set(b_conv_row)
    bias = bias.at[1].set(raw["b1"])
    bias = bias.at[2].set(raw["b2"])
    bias = bias.at[3].set(raw["b3"])
    bias = bias.at[4].set(raw["b4"])
    bias = bias.at[5].set(bt_row)

    return {
        "m_conv": m_conv_p.astype(jnp.bfloat16),
        "w1": w1_p.astype(jnp.bfloat16),
        "w_hidden": w_hidden.astype(jnp.bfloat16),
        "wt": wt_p.astype(jnp.bfloat16),
        "bias": bias,
    }


def ref_forward(seq, raw):
    """Pure-JAX f32 reference mirroring the PyTorch module."""
    x = seq.reshape(-1, 1, KH, OBS_SIZE)
    wc = raw["w_conv"][:, 0, :, 0]                                    # (6, 4)
    conv = jnp.einsum("bhw,ch->bcw", x[:, 0], wc) + raw["b_conv"][None, :, None]
    h = jnp.maximum(conv, 0.0).reshape(-1, CONV_FLAT)                 # NCHW flatten
    for i in (1, 2, 3, 4):
        h = jnp.maximum(h @ raw[f"w{i}"] + raw[f"b{i}"], 0.0)
    logits = h @ raw["wt"] + raw["bt"]
    return jax.nn.log_softmax(logits, axis=1)


if __name__ == "__main__":
    key = jax.random.PRNGKey(0)
    k_seq, k_par = jax.random.split(key)

    B = 8
    seq = jax.random.normal(k_seq, (B, KH, OBS_SIZE), dtype=jnp.float32)  # views to (B,1,4,21)

    raw = init_raw_params(k_par)
    params = pack_kernel_params(raw)

    out = convnet_forward(seq, params)
    out = jax.block_until_ready(out)

    ref = ref_forward(seq, raw)
    assert out.shape == (B, N_OUT), out.shape
    max_err = float(jnp.max(jnp.abs(out - ref)))
    # bf16 matmul operands (f32 accumulation) -> relaxed tolerance vs f32 ref.
    assert jnp.allclose(out, ref, atol=2e-2, rtol=2e-2), max_err

    print("KERNEL_OK")
</pallas_src>

<mosaic_0001>
module attributes {stable_mosaic.version = 11 : i64} {
  func.func @_convnet_kernel(%arg0: i32, %arg1: memref<16x84xf32, #tpu.memory_space<vmem>>, %arg2: memref<84x128xbf16, #tpu.memory_space<vmem>>, %arg3: memref<128x256xbf16, #tpu.memory_space<vmem>>, %arg4: memref<3x256x256xbf16, #tpu.memory_space<vmem>>, %arg5: memref<256x128xbf16, #tpu.memory_space<vmem>>, %arg6: memref<8x256xf32, #tpu.memory_space<vmem>>, %arg7: memref<16x128xf32, #tpu.memory_space<vmem>>) attributes {dimension_semantics = [#tpu.dimension_semantics<parallel>], iteration_bounds = array<i64: 1>, scalar_prefetch = 0 : i64, scratch_operands = 0 : i64, tpu.core_type = #tpu.core_type<tc>, window_params = [{transform_indices = @transform_0, window_bounds = array<i64: 16, 84>}, {pipeline_mode = #tpu.pipeline_mode<synchronous>, transform_indices = @transform_1, window_bounds = array<i64: 84, 128>}, {pipeline_mode = #tpu.pipeline_mode<synchronous>, transform_indices = @transform_2, window_bounds = array<i64: 128, 256>}, {pipeline_mode = #tpu.pipeline_mode<synchronous>, transform_indices = @transform_3, window_bounds = array<i64: 3, 256, 256>}, {pipeline_mode = #tpu.pipeline_mode<synchronous>, transform_indices = @transform_4, window_bounds = array<i64: 256, 128>}, {pipeline_mode = #tpu.pipeline_mode<synchronous>, transform_indices = @transform_5, window_bounds = array<i64: 8, 256>}, {transform_indices = @transform_6, window_bounds = array<i64: 16, 128>}]} {
    %c0 = arith.constant 0 : index
    %c0_0 = arith.constant 0 : index
    %0 = vector.load %arg1[%c0, %c0_0] : memref<16x84xf32, #tpu.memory_space<vmem>>, vector<16x84xf32>
    %1 = arith.truncf %0 : vector<16x84xf32> to vector<16x84xbf16>
    %c0_1 = arith.constant 0 : index
    %c0_2 = arith.constant 0 : index
    %2 = vector.load %arg2[%c0_1, %c0_2] : memref<84x128xbf16, #tpu.memory_space<vmem>>, vector<84x128xbf16>
    %cst = arith.constant dense<0.000000e+00> : vector<16x128xf32>
    %3 = tpu.matmul %1, %2, %cst {dimension_numbers = #tpu.dot_dimension_numbers<[1], [0], [0], [1], [0, 0, 1, 1], [], []>} : vector<16x84xbf16>, vector<84x128xbf16>, vector<16x128xf32> -> vector<16x128xf32>
    %c0_3 = arith.constant 0 : index
    %c0_4 = arith.constant 0 : index
    %4 = vector.load %arg6[%c0_3, %c0_4] : memref<8x256xf32, #tpu.memory_space<vmem>>, vector<1x128xf32>
    %5 = vector.broadcast %4 : vector<1x128xf32> to vector<16x128xf32>
    %6 = arith.addf %3, %5 : vector<16x128xf32>
    %cst_5 = arith.constant 0.000000e+00 : f32
    %7 = vector.broadcast %cst_5 : f32 to vector<16x128xf32>
    %8 = arith.maximumf %6, %7 : vector<16x128xf32>
    %9 = arith.truncf %8 : vector<16x128xf32> to vector<16x128xbf16>
    %c0_6 = arith.constant 0 : index
    %c0_7 = arith.constant 0 : index
    %10 = vector.load %arg3[%c0_6, %c0_7] : memref<128x256xbf16, #tpu.memory_space<vmem>>, vector<128x256xbf16>
    %cst_8 = arith.constant dense<0.000000e+00> : vector<16x256xf32>
    %11 = tpu.matmul %9, %10, %cst_8 {dimension_numbers = #tpu.dot_dimension_numbers<[1], [0], [0], [1], [0, 0, 1, 1], [], []>} : vector<16x128xbf16>, vector<128x256xbf16>, vector<16x256xf32> -> vector<16x256xf32>
    %c1 = arith.constant 1 : index
    %c0_9 = arith.constant 0 : index
    %12 = vector.load %arg6[%c1, %c0_9] : memref<8x256xf32, #tpu.memory_space<vmem>>, vector<1x256xf32>
    %13 = vector.broadcast %12 : vector<1x256xf32> to vector<16x256xf32>
    %14 = arith.addf %11, %13 : vector<16x256xf32>
    %cst_10 = arith.constant 0.000000e+00 : f32
    %15 = vector.broadcast %cst_10 : f32 to vector<16x256xf32>
    %16 = arith.maximumf %14, %15 : vector<16x256xf32>
    %17 = arith.truncf %16 : vector<16x256xf32> to vector<16x256xbf16>
    %c0_11 = arith.constant 0 : index
    %c0_12 = arith.constant 0 : index
    %c0_13 = arith.constant 0 : index
    %18 = vector.load %arg4[%c0_11, %c0_12, %c0_13] : memref<3x256x256xbf16, #tpu.memory_space<vmem>>, vector<1x256x256xbf16>
    %19 = vector.shape_cast %18 : vector<1x256x256xbf16> to vector<256x256xbf16>
    %cst_14 = arith.constant dense<0.000000e+00> : vector<16x256xf32>
    %20 = tpu.matmul %17, %19, %cst_14 {dimension_numbers = #tpu.dot_dimension_numbers<[1], [0], [0], [1], [0, 0, 1, 1], [], []>} : vector<16x256xbf16>, vector<256x256xbf16>, vector<16x256xf32> -> vector<16x256xf32>
    %c2 = arith.constant 2 : index
    %c0_15 = arith.constant 0 : index
    %21 = vector.load %arg6[%c2, %c0_15] : memref<8x256xf32, #tpu.memory_space<vmem>>, vector<1x256xf32>
    %22 = vector.broadcast %21 : vector<1x256xf32> to vector<16x256xf32>
    %23 = arith.addf %20, %22 : vector<16x256xf32>
    %cst_16 = arith.constant 0.000000e+00 : f32
    %24 = vector.broadcast %cst_16 : f32 to vector<16x256xf32>
    %25 = arith.maximumf %23, %24 : vector<16x256xf32>
    %26 = arith.truncf %25 : vector<16x256xf32> to vector<16x256xbf16>
    %c1_17 = arith.constant 1 : index
    %c0_18 = arith.constant 0 : index
    %c0_19 = arith.constant 0 : index
    %27 = vector.load %arg4[%c1_17, %c0_18, %c0_19] : memref<3x256x256xbf16, #tpu.memory_space<vmem>>, vector<1x256x256xbf16>
    %28 = vector.shape_cast %27 : vector<1x256x256xbf16> to vector<256x256xbf16>
    %cst_20 = arith.constant dense<0.000000e+00> : vector<16x256xf32>
    %29 = tpu.matmul %26, %28, %cst_20 {dimension_numbers = #tpu.dot_dimension_numbers<[1], [0], [0], [1], [0, 0, 1, 1], [], []>} : vector<16x256xbf16>, vector<256x256xbf16>, vector<16x256xf32> -> vector<16x256xf32>
    %c3 = arith.constant 3 : index
    %c0_21 = arith.constant 0 : index
    %30 = vector.load %arg6[%c3, %c0_21] : memref<8x256xf32, #tpu.memory_space<vmem>>, vector<1x256xf32>
    %31 = vector.broadcast %30 : vector<1x256xf32> to vector<16x256xf32>
    %32 = arith.addf %29, %31 : vector<16x256xf32>
    %cst_22 = arith.constant 0.000000e+00 : f32
    %33 = vector.broadcast %cst_22 : f32 to vector<16x256xf32>
    %34 = arith.maximumf %32, %33 : vector<16x256xf32>
    %35 = arith.truncf %34 : vector<16x256xf32> to vector<16x256xbf16>
    %c2_23 = arith.constant 2 : index
    %c0_24 = arith.constant 0 : index
    %c0_25 = arith.constant 0 : index
    %36 = vector.load %arg4[%c2_23, %c0_24, %c0_25] : memref<3x256x256xbf16, #tpu.memory_space<vmem>>, vector<1x256x256xbf16>
    %37 = vector.shape_cast %36 : vector<1x256x256xbf16> to vector<256x256xbf16>
    %cst_26 = arith.constant dense<0.000000e+00> : vector<16x256xf32>
    %38 = tpu.matmul %35, %37, %cst_26 {dimension_numbers = #tpu.dot_dimension_numbers<[1], [0], [0], [1], [0, 0, 1, 1], [], []>} : vector<16x256xbf16>, vector<256x256xbf16>, vector<16x256xf32> -> vector<16x256xf32>
    %c4 = arith.constant 4 : index
    %c0_27 = arith.constant 0 : index
    %39 = vector.load %arg6[%c4, %c0_27] : memref<8x256xf32, #tpu.memory_space<vmem>>, vector<1x256xf32>
    %40 = vector.broadcast %39 : vector<1x256xf32> to vector<16x256xf32>
    %41 = arith.addf %38, %40 : vector<16x256xf32>
    %cst_28 = arith.constant 0.000000e+00 : f32
    %42 = vector.broadcast %cst_28 : f32 to vector<16x256xf32>
    %43 = arith.maximumf %41, %42 : vector<16x256xf32>
    %44 = arith.truncf %43 : vector<16x256xf32> to vector<16x256xbf16>
    %c0_29 = arith.constant 0 : index
    %c0_30 = arith.constant 0 : index
    %45 = vector.load %arg5[%c0_29, %c0_30] : memref<256x128xbf16, #tpu.memory_space<vmem>>, vector<256x128xbf16>
    %cst_31 = arith.constant dense<0.000000e+00> : vector<16x128xf32>
    %46 = tpu.matmul %44, %45, %cst_31 {dimension_numbers = #tpu.dot_dimension_numbers<[1], [0], [0], [1], [0, 0, 1, 1], [], []>} : vector<16x256xbf16>, vector<256x128xbf16>, vector<16x128xf32> -> vector<16x128xf32>
    %c5 = arith.constant 5 : index
    %c0_32 = arith.constant 0 : index
    %47 = vector.load %arg6[%c5, %c0_32] : memref<8x256xf32, #tpu.memory_space<vmem>>, vector<1x128xf32>
    %48 = vector.broadcast %47 : vector<1x128xf32> to vector<16x128xf32>
    %49 = arith.addf %46, %48 : vector<16x128xf32>
    %cst_33 = arith.constant dense<0xFF800000> : vector<16xf32>
    %50 = vector.multi_reduction <maximumf>, %49, %cst_33 [1] : vector<16x128xf32> to vector<16xf32>
    %51 = vector.shape_cast %50 : vector<16xf32> to vector<16x1xf32>
    %52 = vector.broadcast %51 : vector<16x1xf32> to vector<16x128xf32>
    %53 = arith.subf %49, %52 : vector<16x128xf32>
    %54 = math.exp %53 : vector<16x128xf32>
    %cst_34 = arith.constant dense<0.000000e+00> : vector<16xf32>
    %55 = vector.multi_reduction <add>, %54, %cst_34 [1] : vector<16x128xf32> to vector<16xf32>
    %56 = vector.shape_cast %55 : vector<16xf32> to vector<16x1xf32>
    %57 = math.log %56 : vector<16x1xf32>
    %58 = vector.broadcast %57 : vector<16x1xf32> to vector<16x128xf32>
    %59 = arith.subf %53, %58 : vector<16x128xf32>
    %c0_35 = arith.constant 0 : index
    %c0_36 = arith.constant 0 : index
    %60 = vector.load %arg7[%c0_35, %c0_36] : memref<16x128xf32, #tpu.memory_space<vmem>>, vector<16x128xf32>
    tpu.vector_store %arg7[%c0_35, %c0_36], %59 {strides = array<i32>} : memref<16x128xf32, #tpu.memory_space<vmem>>, vector<16x128xf32>,
    return
  }
  func.func @transform_0(%arg0: i32) -> (i32, i32) {
    %c0_i32 = arith.constant 0 : i32
    %c0_i32_0 = arith.constant 0 : i32
    return %arg0, %c0_i32 : i32, i32
  }
  func.func @transform_1(%arg0: i32) -> (i32, i32) {
    %c0_i32 = arith.constant 0 : i32
    %c0_i32_0 = arith.constant 0 : i32
    %c0_i32_1 = arith.constant 0 : i32
    return %c0_i32, %c0_i32_0 : i32, i32
  }
  func.func @transform_2(%arg0: i32) -> (i32, i32) {
    %c0_i32 = arith.constant 0 : i32
    %c0_i32_0 = arith.constant 0 : i32
    %c0_i32_1 = arith.constant 0 : i32
    return %c0_i32, %c0_i32_0 : i32, i32
  }
  func.func @transform_3(%arg0: i32) -> (i32, i32, i32) {
    %c0_i32 = arith.constant 0 : i32
    %c0_i32_0 = arith.constant 0 : i32
    %c0_i32_1 = arith.constant 0 : i32
    %c0_i32_2 = arith.constant 0 : i32
    return %c0_i32, %c0_i32_0, %c0_i32_1 : i32, i32, i32
  }
  func.func @transform_4(%arg0: i32) -> (i32, i32) {
    %c0_i32 = arith.constant 0 : i32
    %c0_i32_0 = arith.constant 0 : i32
    %c0_i32_1 = arith.constant 0 : i32
    return %c0_i32, %c0_i32_0 : i32, i32
  }
  func.func @transform_5(%arg0: i32) -> (i32, i32) {
    %c0_i32 = arith.constant 0 : i32
    %c0_i32_0 = arith.constant 0 : i32
    %c0_i32_1 = arith.constant 0 : i32
    return %c0_i32, %c0_i32_0 : i32, i32
  }
  func.func @transform_6(%arg0: i32) -> (i32, i32) {
    %c0_i32 = arith.constant 0 : i32
    %c0_i32_0 = arith.constant 0 : i32
    return %arg0, %c0_i32 : i32, i32
  }
}

</mosaic_0001>

<llo_original>
// kernel: tpu_custom_call.1
$region0: #{tpu_custom_call.1}
  #allocation0 [shape = 'u32[]', space=smem, size = 0x4, offset = 0x4, fixed_abs, tag = 'smem constant byte address 0x4 - core index']
  #allocation1 [shape = 'u32[144,128]{1,0:T(1,128)}', space=vmem, size = 0x12000, scoped, tag = 'internal scratch']
  %s0 = inlined_call_operand.hbm [shape: f32[16,84], index: 0, kind: input, shape index: {}]
  %s1 = inlined_call_operand.hbm [shape: bf16[84,128], index: 1, kind: input, shape index: {}]
  %s2 = inlined_call_operand.hbm [shape: bf16[128,256], index: 2, kind: input, shape index: {}]
  %s3 = inlined_call_operand.hbm [shape: bf16[3,256,256], index: 3, kind: input, shape index: {}]
  %s4 = inlined_call_operand.hbm [shape: bf16[256,128], index: 4, kind: input, shape index: {}]
  %s5 = inlined_call_operand.vmem [shape: f32[8,256], index: 5, kind: input, shape index: {}]
  %s6 = inlined_call_operand.hbm [shape: f32[16,128], index: 6, kind: output, shape index: {}]
  %s7 = sld [smem:[#allocation0]]
  $region54: #{tpu_custom_call.1} parent=0
    _
  %s9 = ssub.s32 1, %s7
  %s10 = scalar_select 0, %s9, %s7
  $region1: #{tpu_custom_call.1} parent=0
    #allocation2 [shape = 'u8[8192]{0}', space=vmem, size = 0x2000, scoped, tag = 'input window, operand 0, single buffered']
    #allocation3 [shape = 's32[1]{0}', space=sflag, size = 0x4, scoped, tag = 'scoped memory for tpu_custom_call.1']
    #allocation4 [shape = 's32[1]{0}', space=sflag, size = 0x4, scoped, tag = 'scoped memory for tpu_custom_call.1']
    #allocation5 [shape = 'u8[22528]{0}', space=vmem, size = 0x5800, scoped, tag = 'input window, operand 1, single buffered']
    #allocation6 [shape = 's32[1]{0}', space=sflag, size = 0x4, scoped, tag = 'scoped memory for tpu_custom_call.1']
    #allocation7 [shape = 'u8[65536]{0}', space=vmem, size = 0x10000, scoped, tag = 'input window, operand 2, single buffered']
    #allocation8 [shape = 'u8[393216]{0}', space=vmem, size = 0x60000, scoped, tag = 'input window, operand 3, single buffered']
    #allocation9 [shape = 's32[1]{0}', space=sflag, size = 0x4, scoped, tag = 'scoped memory for tpu_custom_call.1']
    #allocation10 [shape = 'u8[65536]{0}', space=vmem, size = 0x10000, scoped, tag = 'input window, operand 4, single buffered']
    #allocation11 [shape = 'u8[8192]{0}', space=vmem, size = 0x2000, scoped, tag = 'output window, operand 0, single buffered']
    %11 = vsyncpa [#allocation3], 0
    %12 = vsyncpa [#allocation6], 0
    %13 = vsyncpa [#allocation9], 0
    %14 = vsyncpa [#allocation4], 0
    // Predicated region
    $region2: #{tpu_custom_call.1} parent=1 // pred_check
      _
    $region3: #{tpu_custom_call.1} parent=1 // pred_check_branch
      %16 = sbr.rel (0) target = $region5
    $region4: #{tpu_custom_call.1} parent=1 // pred_region
      %s18 = ssub.s32 256, 256
      %19 = vsyncadd [#allocation3], %s18
      %s20 = sshll.u32 [#allocation2], 4
      %s21 = int_to_ptr.vmem [resolvable:$true] %s20
      %26 = dma.hbm_to_vmem [thread:$0]  %s0, 256, %s21, [#allocation3], 128, 128, 8
    $region5: #{tpu_custom_call.1} parent=1 // pred_fallthru
      _
    // Predicated region
    $region6: #{tpu_custom_call.1} parent=1 // pred_check
      _
    $region7: #{tpu_custom_call.1} parent=1 // pred_check_branch
      %28 = sbr.rel (0) target = $region9
    $region8: #{tpu_custom_call.1} parent=1 // pred_region
      %s30 = ssub.s32 704, 704
      %31 = vsyncadd [#allocation6], %s30
      %s32 = sshll.u32 [#allocation5], 4
      %s33 = int_to_ptr.vmem [resolvable:$true] %s32
      %38 = dma.hbm_to_vmem [thread:$0]  %s1, 704, %s33, [#allocation6], 64, 64, 4
    $region9: #{tpu_custom_call.1} parent=1 // pred_fallthru
      _
    // Predicated region
    $region10: #{tpu_custom_call.1} parent=1 // pred_check
      _
    $region11: #{tpu_custom_call.1} parent=1 // pred_check_branch
      %40 = sbr.rel (0) target = $region13
    $region12: #{tpu_custom_call.1} parent=1 // pred_region
      %s42 = ssub.s32 2048, 2048
      %43 = vsyncadd [#allocation6], %s42
      %s44 = sshll.u32 [#allocation7], 4
      %s45 = int_to_ptr.vmem [resolvable:$true] %s44
      %50 = dma.hbm_to_vmem [thread:$0]  %s2, 2048, %s45, [#allocation6], 128, 128, 8
    $region13: #{tpu_custom_call.1} parent=1 // pred_fallthru
      _
    // Predicated region
    $region14: #{tpu_custom_call.1} parent=1 // pred_check
      _
    $region15: #{tpu_custom_call.1} parent=1 // pred_check_branch
      %52 = sbr.rel (0) target = $region17
    $region16: #{tpu_custom_call.1} parent=1 // pred_region
      %s54 = ssub.s32 12288, 12288
      %55 = vsyncadd [#allocation9], %s54
      %s56 = sshll.u32 [#allocation8], 4
      %s57 = int_to_ptr.vmem [resolvable:$true] %s56
      %62 = dma.hbm_to_vmem [thread:$0]  %s3, 12288, %s57, [#allocation9], 128, 128, 8
    $region17: #{tpu_custom_call.1} parent=1 // pred_fallthru
      _
    // Predicated region
    $region18: #{tpu_custom_call.1} parent=1 // pred_check
      _
    $region19: #{tpu_custom_call.1} parent=1 // pred_check_branch
      %64 = sbr.rel (0) target = $region21
    $region20: #{tpu_custom_call.1} parent=1 // pred_region
      %s66 = ssub.s32 2048, 2048
      %67 = vsyncadd [#allocation9], %s66
      %s68 = sshll.u32 [#allocation10], 4
      %s69 = int_to_ptr.vmem [resolvable:$true] %s68
      %74 = dma.hbm_to_vmem [thread:$0]  %s4, 2048, %s69, [#allocation9], 64, 64, 4
    $region21: #{tpu_custom_call.1} parent=1 // pred_fallthru
      _
    // Predicated region
    $region22: #{tpu_custom_call.1} parent=1 // pred_check
      _
    $region23: #{tpu_custom_call.1} parent=1 // pred_check_branch
      %76 = sbr.rel (0) target = $region25
    $region24: #{tpu_custom_call.1} parent=1 // pred_region
      _
    $region25: #{tpu_custom_call.1} parent=1 // pred_fallthru
      _
    // Predicated region
    $region26: #{tpu_custom_call.1} parent=1 // pred_check
      _
    $region27: #{tpu_custom_call.1} parent=1 // pred_check_branch
      %78 = sbr.rel (0) target = $region29
    $region28: #{tpu_custom_call.1} parent=1 // pred_region
      %79 = dma.done [#allocation3], 256
    $region29: #{tpu_custom_call.1} parent=1 // pred_fallthru
      _
    // Predicated region
    $region30: #{tpu_custom_call.1} parent=1 // pred_check
      _
    $region31: #{tpu_custom_call.1} parent=1 // pred_check_branch
      %81 = sbr.rel (0) target = $region33
    $region32: #{tpu_custom_call.1} parent=1 // pred_region
      %82 = dma.done [#allocation6], 704
    $region33: #{tpu_custom_call.1} parent=1 // pred_fallthru
      _
    // Predicated region
    $region34: #{tpu_custom_call.1} parent=1 // pred_check
      _
    $region35: #{tpu_custom_call.1} parent=1 // pred_check_branch
      %84 = sbr.rel (0) target = $region37
    $region36: #{tpu_custom_call.1} parent=1 // pred_region
      %85 = dma.done [#allocation6], 2048
    $region37: #{tpu_custom_call.1} parent=1 // pred_fallthru
      _
    // Predicated region
    $region38: #{tpu_custom_call.1} parent=1 // pred_check
      _
    $region39: #{tpu_custom_call.1} parent=1 // pred_check_branch
      %87 = sbr.rel (0) target = $region41
    $region40: #{tpu_custom_call.1} parent=1 // pred_region
      %88 = dma.done [#allocation9], 12288
    $region41: #{tpu_custom_call.1} parent=1 // pred_fallthru
      _
    // Predicated region
    $region42: #{tpu_custom_call.1} parent=1 // pred_check
      _
    $region43: #{tpu_custom_call.1} parent=1 // pred_check_branch
      %90 = sbr.rel (0) target = $region45
    $region44: #{tpu_custom_call.1} parent=1 // pred_region
      %91 = dma.done [#allocation9], 2048
    $region45: #{tpu_custom_call.1} parent=1 // pred_fallthru
      _
    %v93 = vld [vmem:[#allocation2] sm:$0xff]
    %v94 = vld [vmem:[#allocation2 + $0x8] sm:$0xff]
    %v95 = vpack.c.bf16 %v94, %v93
    %v96 = vld [vmem:[#allocation5] sm:$0xf]
    %v97 = vld [vmem:[#allocation5 + $0x4] sm:$0xf]
    %v98 = vld [vmem:[#allocation5 + $0x8] sm:$0xf]
    %v99 = vld [vmem:[#allocation5 + $0xc] sm:$0xf]
    %v100 = vld [vmem:[#allocation5 + $0x10] sm:$0xf]
    %v101 = vld [vmem:[#allocation5 + $0x14] sm:$0xf]
    %v102 = vld [vmem:[#allocation5 + $0x18] sm:$0xf]
    %v103 = vld [vmem:[#allocation5 + $0x1c] sm:$0xf]
    %v104 = vld [vmem:[#allocation5 + $0x20] sm:$0xf]
    %v105 = vld [vmem:[#allocation5 + $0x24] sm:$0xf]
    %v106 = vld [vmem:[#allocation5 + $0x28] sm:$0x3]
    %v107 = vld [vmem:[%s5] ss:$0 sm:$0xff]
    %v119 = vunpack.c.l.b16 %v96
    %v120 = vunpack.c.l.b16 %v97
    %v121 = vunpack.c.l.b16 %v98
    %v122 = vunpack.c.l.b16 %v99
    %v123 = vunpack.c.l.b16 %v100
    %v124 = vunpack.c.l.b16 %v101
    %v125 = vunpack.c.l.b16 %v102
    %v126 = vunpack.c.l.b16 %v103
    %v127 = vunpack.c.l.b16 %v104
    %v128 = vunpack.c.l.b16 %v105
    %v129 = vunpack.c.l.b16 %v106
    %v130 = vpack.c.b16 %v120, %v119
    %v131 = vpack.c.b16 %v122, %v121
    %v132 = vpack.c.b16 %v124, %v123
    %v133 = vpack.c.b16 %v126, %v125
    %v134 = vpack.c.b16 %v128, %v127
    %v135 = vpack.c.b16 %v129, %v129
    %vm141 = vcmask 687104
    %v143 = vsel %vm141, %v95, 0
    %vm145 = vcmask 1041408
    %v147 = vsel %vm145, %v135, 0
    %149 = vmatprep.subr.bf16.mxu0 0
    %150 = vmatpush1.bf16.msra.mxu0 %v130
    %151 = vmatprep.subr.bf16.mxu0 0
    %152 = vmatpush1.bf16.msra.mxu0 %v131
    %153 = vmatprep.subr.bf16.mxu0 0
    %154 = vmatpush1.bf16.msra.mxu0 %v132
    %155 = vmatprep.subr.bf16.mxu0 0
    %156 = vmatpush1.bf16.msra.mxu0 %v133
    %157 = vmatprep.subr.bf16.mxu0 0
    %158 = vmatpush1.bf16.msra.mxu0 %v134
    %159 = vmatprep.subr.bf16.mxu0 0
    %160 = vmatpush1.bf16.msra.mxu0 %v147
    %161 = vmatprep.subr.bf16.mxu0 0
    %162 = vmatpush1.bf16.msra.mxu0 0
    %163 = vmatprep.subr.bf16.mxu0 0
    %164 = vmatpush1.bf16.msra.mxu0 0
    %165 = vmatprep.subr.bf16.mxu0 0
    %166 = vmatpush1.bf16.msra.mxu0 0
    %167 = vmatprep.subr.bf16.mxu0 0
    %168 = vmatpush1.bf16.msra.mxu0 0
    %169 = vmatprep.subr.bf16.mxu0 0
    %170 = vmatpush1.bf16.msra.mxu0 0
    %171 = vmatprep.subr.bf16.mxu0 0
    %172 = vmatpush1.bf16.msra.mxu0 0
    %173 = vmatprep.subr.bf16.mxu0 0
    %174 = vmatpush1.bf16.msra.mxu0 0
    %175 = vmatprep.subr.bf16.mxu0 0
    %176 = vmatpush1.bf16.msra.mxu0 0
    %177 = vmatprep.subr.bf16.mxu0 0
    %178 = vmatpush1.bf16.msra.mxu0 0
    %179 = vmatprep.subr.bf16.mxu0 0
    %180 = vmatpush1.bf16.msra.mxu0 0
    %181 = vmatprep.mubr.bf16.mxu0 0
    %182 = vmatmul.mubr.bf16.gmra.mrb[0].mxu0 %v143
    %v183 = vpop.f32.mrb[0].mxu0
    %v184 = vadd.f32 %v107, %v183
    %v185 = vpop.f32.mrb[0].mxu0
    %v186 = vpop.f32.mrb[0].mxu0
    %v187 = vadd.f32 %v107, %v186
    %v188 = vpop.f32.mrb[0].mxu0
    %189 = vdwg.mxu0
    %v190 = vmax.f32 %v184, 0.0
    %v191 = vmax.f32 %v187, 0.0
    %v192 = vpack.c.bf16 %v191, %v190
    %v193 = vld [vmem:[#allocation7] sm:$0xff]
    %v194 = vld [vmem:[#allocation7 + $0x8] sm:$0xff]
    %v195 = vld [vmem:[#allocation7 + $0x10] sm:$0xff]
    %v196 = vld [vmem:[#allocation7 + $0x18] sm:$0xff]
    %v197 = vld [vmem:[#allocation7 + $0x20] sm:$0xff]
    %v198 = vld [vmem:[#allocation7 + $0x28] sm:$0xff]
    %v199 = vld [vmem:[#allocation7 + $0x30] sm:$0xff]
    %v200 = vld [vmem:[#allocation7 + $0x38] sm:$0xff]
    %v201 = vld [vmem:[#allocation7 + $0x40] sm:$0xff]
    %v202 = vld [vmem:[#allocation7 + $0x48] sm:$0xff]
    %v203 = vld [vmem:[#allocation7 + $0x50] sm:$0xff]
    %v204 = vld [vmem:[#allocation7 + $0x58] sm:$0xff]
    %v205 = vld [vmem:[#allocation7 + $0x60] sm:$0xff]
    %v206 = vld [vmem:[#allocation7 + $0x68] sm:$0xff]
    %v207 = vld [vmem:[#allocation7 + $0x70] sm:$0xff]
    %v208 = vld [vmem:[#allocation7 + $0x78] sm:$0xff]
    %s209 = scalar_lea.vmem %s5, 1
    %v210 = vld [vmem:[%s209] ss:$8 sm:$0x3]
    %v212 = vlaneseq
    %v213 = vshrl.u32 %v212, 7
    %v214 = vsub.s32 0, %v213
    %v215 = vrot.slane %v210, %v214
    %v216 = vlaneseq
    %v217 = vshrl.u32 %v216, 7
    %v218 = vsub.s32 1, %v217
    %v219 = vrot.slane %v210, %v218
    %v238 = vunpack.c.l.b16 %v193
    %v239 = vunpack.c.h.b16 %v193
    %v240 = vunpack.c.l.b16 %v194
    %v241 = vunpack.c.h.b16 %v194
    %v242 = vunpack.c.l.b16 %v195
    %v243 = vunpack.c.h.b16 %v195
    %v244 = vunpack.c.l.b16 %v196
    %v245 = vunpack.c.h.b16 %v196
    %v246 = vunpack.c.l.b16 %v197
    %v247 = vunpack.c.h.b16 %v197
    %v248 = vunpack.c.l.b16 %v198
    %v249 = vunpack.c.h.b16 %v198
    %v250 = vunpack.c.l.b16 %v199
    %v251 = vunpack.c.h.b16 %v199
    %v252 = vunpack.c.l.b16 %v200
    %v253 = vunpack.c.h.b16 %v200
    %v254 = vunpack.c.l.b16 %v201
    %v255 = vunpack.c.h.b16 %v201
    %v256 = vunpack.c.l.b16 %v202
    %v257 = vunpack.c.h.b16 %v202
    %v258 = vunpack.c.l.b16 %v203
    %v259 = vunpack.c.h.b16 %v203
    %v260 = vunpack.c.l.b16 %v204
    %v261 = vunpack.c.h.b16 %v204
    %v262 = vunpack.c.l.b16 %v205
    %v263 = vunpack.c.h.b16 %v205
    %v264 = vunpack.c.l.b16 %v206
    %v265 = vunpack.c.h.b16 %v206
    %v266 = vunpack.c.l.b16 %v207
    %v267 = vunpack.c.h.b16 %v207
    %v268 = vunpack.c.l.b16 %v208
    %v269 = vunpack.c.h.b16 %v208
    %v270 = vpack.c.b16 %v240, %v238
    %v271 = vpack.c.b16 %v241, %v239
    %v272 = vpack.c.b16 %v244, %v242
    %v273 = vpack.c.b16 %v245, %v243
    %v274 = vpack.c.b16 %v248, %v246
    %v275 = vpack.c.b16 %v249, %v247
    %v276 = vpack.c.b16 %v252, %v250
    %v277 = vpack.c.b16 %v253, %v251
    %v278 = vpack.c.b16 %v256, %v254
    %v279 = vpack.c.b16 %v257, %v255
    %v280 = vpack.c.b16 %v260, %v258
    %v281 = vpack.c.b16 %v261, %v259
    %v282 = vpack.c.b16 %v264, %v262
    %v283 = vpack.c.b16 %v265, %v263
    %v284 = vpack.c.b16 %v268, %v266
    %v285 = vpack.c.b16 %v269, %v267
    %302 = vmatprep.subr.bf16.mxu0 %v271
    %303 = vmatpush1.bf16.msra.mxu0 %v270
    %304 = vmatprep.subr.bf16.mxu0 %v273
    %305 = vmatpush1.bf16.msra.mxu0 %v272
    %306 = vmatprep.subr.bf16.mxu0 %v275
    %307 = vmatpush1.bf16.msra.mxu0 %v274
    %308 = vmatprep.subr.bf16.mxu0 %v277
    %309 = vmatpush1.bf16.msra.mxu0 %v276
    %310 = vmatprep.subr.bf16.mxu0 %v279
    %311 = vmatpush1.bf16.msra.mxu0 %v278
    %312 = vmatprep.subr.bf16.mxu0 %v281
    %313 = vmatpush1.bf16.msra.mxu0 %v280
    %314 = vmatprep.subr.bf16.mxu0 %v283
    %315 = vmatpush1.bf16.msra.mxu0 %v282
    %316 = vmatprep.subr.bf16.mxu0 %v285
    %317 = vmatpush1.bf16.msra.mxu0 %v284
    %318 = vmatprep.subr.bf16.mxu0 0
    %319 = vmatpush1.bf16.msra.mxu0 0
    %320 = vmatprep.subr.bf16.mxu0 0
    %321 = vmatpush1.bf16.msra.mxu0 0
    %322 = vmatprep.subr.bf16.mxu0 0
    %323 = vmatpush1.bf16.msra.mxu0 0
    %324 = vmatprep.subr.bf16.mxu0 0
    %325 = vmatpush1.bf16.msra.mxu0 0
    %326 = vmatprep.subr.bf16.mxu0 0
    %327 = vmatpush1.bf16.msra.mxu0 0
    %328 = vmatprep.subr.bf16.mxu0 0
    %329 = vmatpush1.bf16.msra.mxu0 0
    %330 = vmatprep.subr.bf16.mxu0 0
    %331 = vmatpush1.bf16.msra.mxu0 0
    %332 = vmatprep.subr.bf16.mxu0 0
    %333 = vmatpush1.bf16.msra.mxu0 0
    %334 = vmatprep.mubr.bf16.mxu0 0
    %335 = vmatmul.mubr.bf16.gmra.mrb[0].mxu0 %v192
    %v336 = vpop.f32.mrb[0].mxu0
    %v337 = vadd.f32 %v215, %v336
    %v338 = vpop.f32.mrb[0].mxu0
    %v339 = vadd.f32 %v219, %v338
    %v340 = vpop.f32.mrb[0].mxu0
    %v341 = vadd.f32 %v215, %v340
    %v342 = vpop.f32.mrb[0].mxu0
    %v343 = vadd.f32 %v219, %v342
    %344 = vdwg.mxu0
    %v345 = vmax.f32 %v337, 0.0
    %v346 = vmax.f32 %v339, 0.0
    %v347 = vmax.f32 %v341, 0.0
    %v348 = vmax.f32 %v343, 0.0
    %v349 = vpack.c.bf16 %v347, %v345
    %v350 = vpack.c.bf16 %v348, %v346
    %v351 = vld [vmem:[#allocation8] sm:$0xff]
    %v352 = vld [vmem:[#allocation8 + $0x8] sm:$0xff]
    %v353 = vld [vmem:[#allocation8 + $0x10] sm:$0xff]
    %v354 = vld [vmem:[#allocation8 + $0x18] sm:$0xff]
    %v355 = vld [vmem:[#allocation8 + $0x20] sm:$0xff]
    %v356 = vld [vmem:[#allocation8 + $0x28] sm:$0xff]
    %v357 = vld [vmem:[#allocation8 + $0x30] sm:$0xff]
    %v358 = vld [vmem:[#allocation8 + $0x38] sm:$0xff]
    %v359 = vld [vmem:[#allocation8 + $0x40] sm:$0xff]
    %v360 = vld [vmem:[#allocation8 + $0x48] sm:$0xff]
    %v361 = vld [vmem:[#allocation8 + $0x50] sm:$0xff]
    %v362 = vld [vmem:[#allocation8 + $0x58] sm:$0xff]
    %v363 = vld [vmem:[#allocation8 + $0x60] sm:$0xff]
    %v364 = vld [vmem:[#allocation8 + $0x68] sm:$0xff]
    %v365 = vld [vmem:[#allocation8 + $0x70] sm:$0xff]
    %v366 = vld [vmem:[#allocation8 + $0x78] sm:$0xff]
    %v367 = vld [vmem:[#allocation8 + $0x80] sm:$0xff]
    %v368 = vld [vmem:[#allocation8 + $0x88] sm:$0xff]
    %v369 = vld [vmem:[#allocation8 + $0x90] sm:$0xff]
    %v370 = vld [vmem:[#allocation8 + $0x98] sm:$0xff]
    %v371 = vld [vmem:[#allocation8 + $0xa0] sm:$0xff]
    %v372 = vld [vmem:[#allocation8 + $0xa8] sm:$0xff]
    %v373 = vld [vmem:[#allocation8 + $0xb0] sm:$0xff]
    %v374 = vld [vmem:[#allocation8 + $0xb8] sm:$0xff]
    %v375 = vld [vmem:[#allocation8 + $0xc0] sm:$0xff]
    %v376 = vld [vmem:[#allocation8 + $0xc8] sm:$0xff]
    %v377 = vld [vmem:[#allocation8 + $0xd0] sm:$0xff]
    %v378 = vld [vmem:[#allocation8 + $0xd8] sm:$0xff]
    %v379 = vld [vmem:[#allocation8 + $0xe0] sm:$0xff]
    %v380 = vld [vmem:[#allocation8 + $0xe8] sm:$0xff]
    %v381 = vld [vmem:[#allocation8 + $0xf0] sm:$0xff]
    %v382 = vld [vmem:[#allocation8 + $0xf8] sm:$0xff]
    %s383 = scalar_lea.vmem %s5, 2
    %v384 = vld [vmem:[%s383] ss:$8 sm:$0x3]
    %v386 = vlaneseq
    %v387 = vshrl.u32 %v386, 7
    %v388 = vsub.s32 0, %v387
    %v389 = vrot.slane %v384, %v388
    %v390 = vlaneseq
    %v391 = vshrl.u32 %v390, 7
    %v392 = vsub.s32 1, %v391
    %v393 = vrot.slane %v384, %v392
    %v428 = vunpack.c.l.b16 %v351
    %v429 = vunpack.c.h.b16 %v351
    %v430 = vunpack.c.l.b16 %v352
    %v431 = vunpack.c.h.b16 %v352
    %v432 = vunpack.c.l.b16 %v353
    %v433 = vunpack.c.h.b16 %v353
    %v434 = vunpack.c.l.b16 %v354
    %v435 = vunpack.c.h.b16 %v354
    %v436 = vunpack.c.l.b16 %v355
    %v437 = vunpack.c.h.b16 %v355
    %v438 = vunpack.c.l.b16 %v356
    %v439 = vunpack.c.h.b16 %v356
    %v440 = vunpack.c.l.b16 %v357
    %v441 = vunpack.c.h.b16 %v357
    %v442 = vunpack.c.l.b16 %v358
    %v443 = vunpack.c.h.b16 %v358
    %v444 = vunpack.c.l.b16 %v359
    %v445 = vunpack.c.h.b16 %v359
    %v446 = vunpack.c.l.b16 %v360
    %v447 = vunpack.c.h.b16 %v360
    %v448 = vunpack.c.l.b16 %v361
    %v449 = vunpack.c.h.b16 %v361
    %v450 = vunpack.c.l.b16 %v362
    %v451 = vunpack.c.h.b16 %v362
    %v452 = vunpack.c.l.b16 %v363
    %v453 = vunpack.c.h.b16 %v363
    %v454 = vunpack.c.l.b16 %v364
    %v455 = vunpack.c.h.b16 %v364
    %v456 = vunpack.c.l.b16 %v365
    %v457 = vunpack.c.h.b16 %v365
    %v458 = vunpack.c.l.b16 %v366
    %v459 = vunpack.c.h.b16 %v366
    %v460 = vunpack.c.l.b16 %v367
    %v461 = vunpack.c.h.b16 %v367
    %v462 = vunpack.c.l.b16 %v368
    %v463 = vunpack.c.h.b16 %v368
    %v464 = vunpack.c.l.b16 %v369
    %v465 = vunpack.c.h.b16 %v369
    %v466 = vunpack.c.l.b16 %v370
    %v467 = vunpack.c.h.b16 %v370
    %v468 = vunpack.c.l.b16 %v371
    %v469 = vunpack.c.h.b16 %v371
    %v470 = vunpack.c.l.b16 %v372
    %v471 = vunpack.c.h.b16 %v372
    %v472 = vunpack.c.l.b16 %v373
    %v473 = vunpack.c.h.b16 %v373
    %v474 = vunpack.c.l.b16 %v374
    %v475 = vunpack.c.h.b16 %v374
    %v476 = vunpack.c.l.b16 %v375
    %v477 = vunpack.c.h.b16 %v375
    %v478 = vunpack.c.l.b16 %v376
    %v479 = vunpack.c.h.b16 %v376
    %v480 = vunpack.c.l.b16 %v377
    %v481 = vunpack.c.h.b16 %v377
    %v482 = vunpack.c.l.b16 %v378
    %v483 = vunpack.c.h.b16 %v378
    %v484 = vunpack.c.l.b16 %v379
    %v485 = vunpack.c.h.b16 %v379
    %v486 = vunpack.c.l.b16 %v380
    %v487 = vunpack.c.h.b16 %v380
    %v488 = vunpack.c.l.b16 %v381
    %v489 = vunpack.c.h.b16 %v381
    %v490 = vunpack.c.l.b16 %v382
    %v491 = vunpack.c.h.b16 %v382
    %v492 = vpack.c.b16 %v430, %v428
    %v493 = vpack.c.b16 %v431, %v429
    %v494 = vpack.c.b16 %v434, %v432
    %v495 = vpack.c.b16 %v435, %v433
    %v496 = vpack.c.b16 %v438, %v436
    %v497 = vpack.c.b16 %v439, %v437
    %v498 = vpack.c.b16 %v442, %v440
    %v499 = vpack.c.b16 %v443, %v441
    %v500 = vpack.c.b16 %v446, %v444
    %v501 = vpack.c.b16 %v447, %v445
    %v502 = vpack.c.b16 %v450, %v448
    %v503 = vpack.c.b16 %v451, %v449
    %v504 = vpack.c.b16 %v454, %v452
    %v505 = vpack.c.b16 %v455, %v453
    %v506 = vpack.c.b16 %v458, %v456
    %v507 = vpack.c.b16 %v459, %v457
    %v508 = vpack.c.b16 %v462, %v460
    %v509 = vpack.c.b16 %v463, %v461
    %v510 = vpack.c.b16 %v466, %v464
    %v511 = vpack.c.b16 %v467, %v465
    %v512 = vpack.c.b16 %v470, %v468
    %v513 = vpack.c.b16 %v471, %v469
    %v514 = vpack.c.b16 %v474, %v472
    %v515 = vpack.c.b16 %v475, %v473
    %v516 = vpack.c.b16 %v478, %v476
    %v517 = vpack.c.b16 %v479, %v477
    %v518 = vpack.c.b16 %v482, %v480
    %v519 = vpack.c.b16 %v483, %v481
    %v520 = vpack.c.b16 %v486, %v484
    %v521 = vpack.c.b16 %v487, %v485
    %v522 = vpack.c.b16 %v490, %v488
    %v523 = vpack.c.b16 %v491, %v489
    %556 = vmatprep.subr.bf16.mxu0 %v493
    %557 = vmatpush1.bf16.msra.mxu0 %v492
    %558 = vmatprep.subr.bf16.mxu0 %v495
    %559 = vmatpush1.bf16.msra.mxu0 %v494
    %560 = vmatprep.subr.bf16.mxu0 %v497
    %561 = vmatpush1.bf16.msra.mxu0 %v496
    %562 = vmatprep.subr.bf16.mxu0 %v499
    %563 = vmatpush1.bf16.msra.mxu0 %v498
    %564 = vmatprep.subr.bf16.mxu0 %v501
    %565 = vmatpush1.bf16.msra.mxu0 %v500
    %566 = vmatprep.subr.bf16.mxu0 %v503
    %567 = vmatpush1.bf16.msra.mxu0 %v502
    %568 = vmatprep.subr.bf16.mxu0 %v505
    %569 = vmatpush1.bf16.msra.mxu0 %v504
    %570 = vmatprep.subr.bf16.mxu0 %v507
    %571 = vmatpush1.bf16.msra.mxu0 %v506
    %572 = vmatprep.subr.bf16.mxu0 %v509
    %573 = vmatpush1.bf16.msra.mxu0 %v508
    %574 = vmatprep.subr.bf16.mxu0 %v511
    %575 = vmatpush1.bf16.msra.mxu0 %v510
    %576 = vmatprep.subr.bf16.mxu0 %v513
    %577 = vmatpush1.bf16.msra.mxu0 %v512
    %578 = vmatprep.subr.bf16.mxu0 %v515
    %579 = vmatpush1.bf16.msra.mxu0 %v514
    %580 = vmatprep.subr.bf16.mxu0 %v517
    %581 = vmatpush1.bf16.msra.mxu0 %v516
    %582 = vmatprep.subr.bf16.mxu0 %v519
    %583 = vmatpush1.bf16.msra.mxu0 %v518
    %584 = vmatprep.subr.bf16.mxu0 %v521
    %585 = vmatpush1.bf16.msra.mxu0 %v520
    %586 = vmatprep.subr.bf16.mxu0 %v523
    %587 = vmatpush1.bf16.msra.mxu0 %v522
    %588 = vmatprep.mubr.bf16.mxu0 %v350
    %589 = vmatmul.mubr.bf16.gmra.mrb[0].mxu0 %v349
    %v590 = vpop.f32.mrb[0].mxu0
    %v591 = vadd.f32 %v389, %v590
    %v592 = vpop.f32.mrb[0].mxu0
    %v593 = vadd.f32 %v393, %v592
    %v594 = vpop.f32.mrb[0].mxu0
    %v595 = vadd.f32 %v389, %v594
    %v596 = vpop.f32.mrb[0].mxu0
    %v597 = vadd.f32 %v393, %v596
    %598 = vdwg.mxu0
    %v599 = vmax.f32 %v591, 0.0
    %v600 = vmax.f32 %v593, 0.0
    %v601 = vmax.f32 %v595, 0.0
    %v602 = vmax.f32 %v597, 0.0
    %v603 = vpack.c.bf16 %v601, %v599
    %v604 = vpack.c.bf16 %v602, %v600
    %s605 = scalar_lea.vmem [#allocation8], 256
    %v606 = vld [vmem:[%s605] sm:$0xff]
    %v607 = vld [vmem:[%s605 + $0x8] sm:$0xff]
    %v608 = vld [vmem:[%s605 + $0x10] sm:$0xff]
    %v609 = vld [vmem:[%s605 + $0x18] sm:$0xff]
    %v610 = vld [vmem:[%s605 + $0x20] sm:$0xff]
    %v611 = vld [vmem:[%s605 + $0x28] sm:$0xff]
    %v612 = vld [vmem:[%s605 + $0x30] sm:$0xff]
    %v613 = vld [vmem:[%s605 + $0x38] sm:$0xff]
    %v614 = vld [vmem:[%s605 + $0x40] sm:$0xff]
    %v615 = vld [vmem:[%s605 + $0x48] sm:$0xff]
    %v616 = vld [vmem:[%s605 + $0x50] sm:$0xff]
    %v617 = vld [vmem:[%s605 + $0x58] sm:$0xff]
    %v618 = vld [vmem:[%s605 + $0x60] sm:$0xff]
    %v619 = vld [vmem:[%s605 + $0x68] sm:$0xff]
    %v620 = vld [vmem:[%s605 + $0x70] sm:$0xff]
    %v621 = vld [vmem:[%s605 + $0x78] sm:$0xff]
    %v622 = vld [vmem:[%s605 + $0x80] sm:$0xff]
    %v623 = vld [vmem:[%s605 + $0x88] sm:$0xff]
    %v624 = vld [vmem:[%s605 + $0x90] sm:$0xff]
    %v625 = vld [vmem:[%s605 + $0x98] sm:$0xff]
    %v626 = vld [vmem:[%s605 + $0xa0] sm:$0xff]
    %v627 = vld [vmem:[%s605 + $0xa8] sm:$0xff]
    %v628 = vld [vmem:[%s605 + $0xb0] sm:$0xff]
    %v629 = vld [vmem:[%s605 + $0xb8] sm:$0xff]
    %v630 = vld [vmem:[%s605 + $0xc0] sm:$0xff]
    %v631 = vld [vmem:[%s605 + $0xc8] sm:$0xff]
    %v632 = vld [vmem:[%s605 + $0xd0] sm:$0xff]
    %v633 = vld [vmem:[%s605 + $0xd8] sm:$0xff]
    %v634 = vld [vmem:[%s605 + $0xe0] sm:$0xff]
    %v635 = vld [vmem:[%s605 + $0xe8] sm:$0xff]
    %v636 = vld [vmem:[%s605 + $0xf0] sm:$0xff]
    %v637 = vld [vmem:[%s605 + $0xf8] sm:$0xff]
    %s638 = scalar_lea.vmem %s5, 3
    %v639 = vld [vmem:[%s638] ss:$8 sm:$0x3]
    %v641 = vlaneseq
    %v642 = vshrl.u32 %v641, 7
    %v643 = vsub.s32 0, %v642
    %v644 = vrot.slane %v639, %v643
    %v645 = vlaneseq
    %v646 = vshrl.u32 %v645, 7
    %v647 = vsub.s32 1, %v646
    %v648 = vrot.slane %v639, %v647
    %v683 = vunpack.c.l.b16 %v606
    %v684 = vunpack.c.h.b16 %v606
    %v685 = vunpack.c.l.b16 %v607
    %v686 = vunpack.c.h.b16 %v607
    %v687 = vunpack.c.l.b16 %v608
    %v688 = vunpack.c.h.b16 %v608
    %v689 = vunpack.c.l.b16 %v609
    %v690 = vunpack.c.h.b16 %v609
    %v691 = vunpack.c.l.b16 %v610
    %v692 = vunpack.c.h.b16 %v610
    %v693 = vunpack.c.l.b16 %v611
    %v694 = vunpack.c.h.b16 %v611
    %v695 = vunpack.c.l.b16 %v612
    %v696 = vunpack.c.h.b16 %v612
    %v697 = vunpack.c.l.b16 %v613
    %v698 = vunpack.c.h.b16 %v613
    %v699 = vunpack.c.l.b16 %v614
    %v700 = vunpack.c.h.b16 %v614
    %v701 = vunpack.c.l.b16 %v615
    %v702 = vunpack.c.h.b16 %v615
    %v703 = vunpack.c.l.b16 %v616
    %v704 = vunpack.c.h.b16 %v616
    %v705 = vunpack.c.l.b16 %v617
    %v706 = vunpack.c.h.b16 %v617
    %v707 = vunpack.c.l.b16 %v618
    %v708 = vunpack.c.h.b16 %v618
    %v709 = vunpack.c.l.b16 %v619
    %v710 = vunpack.c.h.b16 %v619
    %v711 = vunpack.c.l.b16 %v620
    %v712 = vunpack.c.h.b16 %v620
    %v713 = vunpack.c.l.b16 %v621
    %v714 = vunpack.c.h.b16 %v621
    %v715 = vunpack.c.l.b16 %v622
    %v716 = vunpack.c.h.b16 %v622
    %v717 = vunpack.c.l.b16 %v623
    %v718 = vunpack.c.h.b16 %v623
    %v719 = vunpack.c.l.b16 %v624
    %v720 = vunpack.c.h.b16 %v624
    %v721 = vunpack.c.l.b16 %v625
    %v722 = vunpack.c.h.b16 %v625
    %v723 = vunpack.c.l.b16 %v626
    %v724 = vunpack.c.h.b16 %v626
    %v725 = vunpack.c.l.b16 %v627
    %v726 = vunpack.c.h.b16 %v627
    %v727 = vunpack.c.l.b16 %v628
    %v728 = vunpack.c.h.b16 %v628
    %v729 = vunpack.c.l.b16 %v629
    %v730 = vunpack.c.h.b16 %v629
    %v731 = vunpack.c.l.b16 %v630
    %v732 = vunpack.c.h.b16 %v630
    %v733 = vunpack.c.l.b16 %v631
    %v734 = vunpack.c.h.b16 %v631
    %v735 = vunpack.c.l.b16 %v632
    %v736 = vunpack.c.h.b16 %v632
    %v737 = vunpack.c.l.b16 %v633
    %v738 = vunpack.c.h.b16 %v633
    %v739 = vunpack.c.l.b16 %v634
    %v740 = vunpack.c.h.b16 %v634
    %v741 = vunpack.c.l.b16 %v635
    %v742 = vunpack.c.h.b16 %v635
    %v743 = vunpack.c.l.b16 %v636
    %v744 = vunpack.c.h.b16 %v636
    %v745 = vunpack.c.l.b16 %v637
    %v746 = vunpack.c.h.b16 %v637
    %v747 = vpack.c.b16 %v685, %v683
    %v748 = vpack.c.b16 %v686, %v684
    %v749 = vpack.c.b16 %v689, %v687
    %v750 = vpack.c.b16 %v690, %v688
    %v751 = vpack.c.b16 %v693, %v691
    %v752 = vpack.c.b16 %v694, %v692
    %v753 = vpack.c.b16 %v697, %v695
    %v754 = vpack.c.b16 %v698, %v696
    %v755 = vpack.c.b16 %v701, %v699
    %v756 = vpack.c.b16 %v702, %v700
    %v757 = vpack.c.b16 %v705, %v703
    %v758 = vpack.c.b16 %v706, %v704
    %v759 = vpack.c.b16 %v709, %v707
    %v760 = vpack.c.b16 %v710, %v708
    %v761 = vpack.c.b16 %v713, %v711
    %v762 = vpack.c.b16 %v714, %v712
    %v763 = vpack.c.b16 %v717, %v715
    %v764 = vpack.c.b16 %v718, %v716
    %v765 = vpack.c.b16 %v721, %v719
    %v766 = vpack.c.b16 %v722, %v720
    %v767 = vpack.c.b16 %v725, %v723
    %v768 = vpack.c.b16 %v726, %v724
    %v769 = vpack.c.b16 %v729, %v727
    %v770 = vpack.c.b16 %v730, %v728
    %v771 = vpack.c.b16 %v733, %v731
    %v772 = vpack.c.b16 %v734, %v732
    %v773 = vpack.c.b16 %v737, %v735
    %v774 = vpack.c.b16 %v738, %v736
    %v775 = vpack.c.b16 %v741, %v739
    %v776 = vpack.c.b16 %v742, %v740
    %v777 = vpack.c.b16 %v745, %v743
    %v778 = vpack.c.b16 %v746, %v744
    %811 = vmatprep.subr.bf16.mxu0 %v748
    %812 = vmatpush1.bf16.msra.mxu0 %v747
    %813 = vmatprep.subr.bf16.mxu0 %v750
    %814 = vmatpush1.bf16.msra.mxu0 %v749
    %815 = vmatprep.subr.bf16.mxu0 %v752
    %816 = vmatpush1.bf16.msra.mxu0 %v751
    %817 = vmatprep.subr.bf16.mxu0 %v754
    %818 = vmatpush1.bf16.msra.mxu0 %v753
    %819 = vmatprep.subr.bf16.mxu0 %v756
    %820 = vmatpush1.bf16.msra.mxu0 %v755
    %821 = vmatprep.subr.bf16.mxu0 %v758
    %822 = vmatpush1.bf16.msra.mxu0 %v757
    %823 = vmatprep.subr.bf16.mxu0 %v760
    %824 = vmatpush1.bf16.msra.mxu0 %v759
    %825 = vmatprep.subr.bf16.mxu0 %v762
    %826 = vmatpush1.bf16.msra.mxu0 %v761
    %827 = vmatprep.subr.bf16.mxu0 %v764
    %828 = vmatpush1.bf16.msra.mxu0 %v763
    %829 = vmatprep.subr.bf16.mxu0 %v766
    %830 = vmatpush1.bf16.msra.mxu0 %v765
    %831 = vmatprep.subr.bf16.mxu0 %v768
    %832 = vmatpush1.bf16.msra.mxu0 %v767
    %833 = vmatprep.subr.bf16.mxu0 %v770
    %834 = vmatpush1.bf16.msra.mxu0 %v769
    %835 = vmatprep.subr.bf16.mxu0 %v772
    %836 = vmatpush1.bf16.msra.mxu0 %v771
    %837 = vmatprep.subr.bf16.mxu0 %v774
    %838 = vmatpush1.bf16.msra.mxu0 %v773
    %839 = vmatprep.subr.bf16.mxu0 %v776
    %840 = vmatpush1.bf16.msra.mxu0 %v775
    %841 = vmatprep.subr.bf16.mxu0 %v778
    %842 = vmatpush1.bf16.msra.mxu0 %v777
    %843 = vmatprep.mubr.bf16.mxu0 %v604
    %844 = vmatmul.mubr.bf16.gmra.mrb[0].mxu0 %v603
    %v845 = vpop.f32.mrb[0].mxu0
    %v846 = vadd.f32 %v644, %v845
    %v847 = vpop.f32.mrb[0].mxu0
    %v848 = vadd.f32 %v648, %v847
    %v849 = vpop.f32.mrb[0].mxu0
    %v850 = vadd.f32 %v644, %v849
    %v851 = vpop.f32.mrb[0].mxu0
    %v852 = vadd.f32 %v648, %v851
    %853 = vdwg.mxu0
    %v854 = vmax.f32 %v846, 0.0
    %v855 = vmax.f32 %v848, 0.0
    %v856 = vmax.f32 %v850, 0.0
    %v857 = vmax.f32 %v852, 0.0
    %v858 = vpack.c.bf16 %v856, %v854
    %v859 = vpack.c.bf16 %v857, %v855
    %s860 = scalar_lea.vmem [#allocation8], 512
    %v861 = vld [vmem:[%s860] sm:$0xff]
    %v862 = vld [vmem:[%s860 + $0x8] sm:$0xff]
    %v863 = vld [vmem:[%s860 + $0x10] sm:$0xff]
    %v864 = vld [vmem:[%s860 + $0x18] sm:$0xff]
    %v865 = vld [vmem:[%s860 + $0x20] sm:$0xff]
    %v866 = vld [vmem:[%s860 + $0x28] sm:$0xff]
    %v867 = vld [vmem:[%s860 + $0x30] sm:$0xff]
    %v868 = vld [vmem:[%s860 + $0x38] sm:$0xff]
    %v869 = vld [vmem:[%s860 + $0x40] sm:$0xff]
    %v870 = vld [vmem:[%s860 + $0x48] sm:$0xff]
    %v871 = vld [vmem:[%s860 + $0x50] sm:$0xff]
    %v872 = vld [vmem:[%s860 + $0x58] sm:$0xff]
    %v873 = vld [vmem:[%s860 + $0x60] sm:$0xff]
    %v874 = vld [vmem:[%s860 + $0x68] sm:$0xff]
    %v875 = vld [vmem:[%s860 + $0x70] sm:$0xff]
    %v876 = vld [vmem:[%s860 + $0x78] sm:$0xff]
    %v877 = vld [vmem:[%s860 + $0x80] sm:$0xff]
    %v878 = vld [vmem:[%s860 + $0x88] sm:$0xff]
    %v879 = vld [vmem:[%s860 + $0x90] sm:$0xff]
    %v880 = vld [vmem:[%s860 + $0x98] sm:$0xff]
    %v881 = vld [vmem:[%s860 + $0xa0] sm:$0xff]
    %v882 = vld [vmem:[%s860 + $0xa8] sm:$0xff]
    %v883 = vld [vmem:[%s860 + $0xb0] sm:$0xff]
    %v884 = vld [vmem:[%s860 + $0xb8] sm:$0xff]
    %v885 = vld [vmem:[%s860 + $0xc0] sm:$0xff]
    %v886 = vld [vmem:[%s860 + $0xc8] sm:$0xff]
    %v887 = vld [vmem:[%s860 + $0xd0] sm:$0xff]
    %v888 = vld [vmem:[%s860 + $0xd8] sm:$0xff]
    %v889 = vld [vmem:[%s860 + $0xe0] sm:$0xff]
    %v890 = vld [vmem:[%s860 + $0xe8] sm:$0xff]
    %v891 = vld [vmem:[%s860 + $0xf0] sm:$0xff]
    %v892 = vld [vmem:[%s860 + $0xf8] sm:$0xff]
    %s893 = scalar_lea.vmem %s5, 4
    %v894 = vld [vmem:[%s893] ss:$8 sm:$0x3]
    %v896 = vlaneseq
    %v897 = vshrl.u32 %v896, 7
    %v898 = vsub.s32 0, %v897
    %v899 = vrot.slane %v894, %v898
    %v900 = vlaneseq
    %v901 = vshrl.u32 %v900, 7
    %v902 = vsub.s32 1, %v901
    %v903 = vrot.slane %v894, %v902
    %v938 = vunpack.c.l.b16 %v861
    %v939 = vunpack.c.h.b16 %v861
    %v940 = vunpack.c.l.b16 %v862
    %v941 = vunpack.c.h.b16 %v862
    %v942 = vunpack.c.l.b16 %v863
    %v943 = vunpack.c.h.b16 %v863
    %v944 = vunpack.c.l.b16 %v864
    %v945 = vunpack.c.h.b16 %v864
    %v946 = vunpack.c.l.b16 %v865
    %v947 = vunpack.c.h.b16 %v865
    %v948 = vunpack.c.l.b16 %v866
    %v949 = vunpack.c.h.b16 %v866
    %v950 = vunpack.c.l.b16 %v867
    %v951 = vunpack.c.h.b16 %v867
    %v952 = vunpack.c.l.b16 %v868
    %v953 = vunpack.c.h.b16 %v868
    %v954 = vunpack.c.l.b16 %v869
    %v955 = vunpack.c.h.b16 %v869
    %v956 = vunpack.c.l.b16 %v870
    %v957 = vunpack.c.h.b16 %v870
    %v958 = vunpack.c.l.b16 %v871
    %v959 = vunpack.c.h.b16 %v871
    %v960 = vunpack.c.l.b16 %v872
    %v961 = vunpack.c.h.b16 %v872
    %v962 = vunpack.c.l.b16 %v873
    %v963 = vunpack.c.h.b16 %v873
    %v964 = vunpack.c.l.b16 %v874
    %v965 = vunpack.c.h.b16 %v874
    %v966 = vunpack.c.l.b16 %v875
    %v967 = vunpack.c.h.b16 %v875
    %v968 = vunpack.c.l.b16 %v876
    %v969 = vunpack.c.h.b16 %v876
    %v970 = vunpack.c.l.b16 %v877
    %v971 = vunpack.c.h.b16 %v877
    %v972 = vunpack.c.l.b16 %v878
    %v973 = vunpack.c.h.b16 %v878
    %v974 = vunpack.c.l.b16 %v879
    %v975 = vunpack.c.h.b16 %v879
    %v976 = vunpack.c.l.b16 %v880
    %v977 = vunpack.c.h.b16 %v880
    %v978 = vunpack.c.l.b16 %v881
    %v979 = vunpack.c.h.b16 %v881
    %v980 = vunpack.c.l.b16 %v882
    %v981 = vunpack.c.h.b16 %v882
    %v982 = vunpack.c.l.b16 %v883
    %v983 = vunpack.c.h.b16 %v883
    %v984 = vunpack.c.l.b16 %v884
    %v985 = vunpack.c.h.b16 %v884
    %v986 = vunpack.c.l.b16 %v885
    %v987 = vunpack.c.h.b16 %v885
    %v988 = vunpack.c.l.b16 %v886
    %v989 = vunpack.c.h.b16 %v886
    %v990 = vunpack.c.l.b16 %v887
    %v991 = vunpack.c.h.b16 %v887
    %v992 = vunpack.c.l.b16 %v888
    %v993 = vunpack.c.h.b16 %v888
    %v994 = vunpack.c.l.b16 %v889
    %v995 = vunpack.c.h.b16 %v889
    %v996 = vunpack.c.l.b16 %v890
    %v997 = vunpack.c.h.b16 %v890
    %v998 = vunpack.c.l.b16 %v891
    %v999 = vunpack.c.h.b16 %v891
    %v1000 = vunpack.c.l.b16 %v892
    %v1001 = vunpack.c.h.b16 %v892
    %v1002 = vpack.c.b16 %v940, %v938
    %v1003 = vpack.c.b16 %v941, %v939
    %v1004 = vpack.c.b16 %v944, %v942
    %v1005 = vpack.c.b16 %v945, %v943
    %v1006 = vpack.c.b16 %v948, %v946
    %v1007 = vpack.c.b16 %v949, %v947
    %v1008 = vpack.c.b16 %v952, %v950
    %v1009 = vpack.c.b16 %v953, %v951
    %v1010 = vpack.c.b16 %v956, %v954
    %v1011 = vpack.c.b16 %v957, %v955
    %v1012 = vpack.c.b16 %v960, %v958
    %v1013 = vpack.c.b16 %v961, %v959
    %v1014 = vpack.c.b16 %v964, %v962
    %v1015 = vpack.c.b16 %v965, %v963
    %v1016 = vpack.c.b16 %v968, %v966
    %v1017 = vpack.c.b16 %v969, %v967
    %v1018 = vpack.c.b16 %v972, %v970
    %v1019 = vpack.c.b16 %v973, %v971
    %v1020 = vpack.c.b16 %v976, %v974
    %v1021 = vpack.c.b16 %v977, %v975
    %v1022 = vpack.c.b16 %v980, %v978
    %v1023 = vpack.c.b16 %v981, %v979
    %v1024 = vpack.c.b16 %v984, %v982
    %v1025 = vpack.c.b16 %v985, %v983
    %v1026 = vpack.c.b16 %v988, %v986
    %v1027 = vpack.c.b16 %v989, %v987
    %v1028 = vpack.c.b16 %v992, %v990
    %v1029 = vpack.c.b16 %v993, %v991
    %v1030 = vpack.c.b16 %v996, %v994
    %v1031 = vpack.c.b16 %v997, %v995
    %v1032 = vpack.c.b16 %v1000, %v998
    %v1033 = vpack.c.b16 %v1001, %v999
    %1066 = vmatprep.subr.bf16.mxu0 %v1003
    %1067 = vmatpush1.bf16.msra.mxu0 %v1002
    %1068 = vmatprep.subr.bf16.mxu0 %v1005
    %1069 = vmatpush1.bf16.msra.mxu0 %v1004
    %1070 = vmatprep.subr.bf16.mxu0 %v1007
    %1071 = vmatpush1.bf16.msra.mxu0 %v1006
    %1072 = vmatprep.subr.bf16.mxu0 %v1009
    %1073 = vmatpush1.bf16.msra.mxu0 %v1008
    %1074 = vmatprep.subr.bf16.mxu0 %v1011
    %1075 = vmatpush1.bf16.msra.mxu0 %v1010
    %1076 = vmatprep.subr.bf16.mxu0 %v1013
    %1077 = vmatpush1.bf16.msra.mxu0 %v1012
    %1078 = vmatprep.subr.bf16.mxu0 %v1015
    %1079 = vmatpush1.bf16.msra.mxu0 %v1014
    %1080 = vmatprep.subr.bf16.mxu0 %v1017
    %1081 = vmatpush1.bf16.msra.mxu0 %v1016
    %1082 = vmatprep.subr.bf16.mxu0 %v1019
    %1083 = vmatpush1.bf16.msra.mxu0 %v1018
    %1084 = vmatprep.subr.bf16.mxu0 %v1021
    %1085 = vmatpush1.bf16.msra.mxu0 %v1020
    %1086 = vmatprep.subr.bf16.mxu0 %v1023
    %1087 = vmatpush1.bf16.msra.mxu0 %v1022
    %1088 = vmatprep.subr.bf16.mxu0 %v1025
    %1089 = vmatpush1.bf16.msra.mxu0 %v1024
    %1090 = vmatprep.subr.bf16.mxu0 %v1027
    %1091 = vmatpush1.bf16.msra.mxu0 %v1026
    %1092 = vmatprep.subr.bf16.mxu0 %v1029
    %1093 = vmatpush1.bf16.msra.mxu0 %v1028
    %1094 = vmatprep.subr.bf16.mxu0 %v1031
    %1095 = vmatpush1.bf16.msra.mxu0 %v1030
    %1096 = vmatprep.subr.bf16.mxu0 %v1033
    %1097 = vmatpush1.bf16.msra.mxu0 %v1032
    %1098 = vmatprep.mubr.bf16.mxu0 %v859
    %1099 = vmatmul.mubr.bf16.gmra.mrb[0].mxu0 %v858
    %v1100 = vpop.f32.mrb[0].mxu0
    %v1101 = vadd.f32 %v899, %v1100
    %v1102 = vpop.f32.mrb[0].mxu0
    %v1103 = vadd.f32 %v903, %v1102
    %v1104 = vpop.f32.mrb[0].mxu0
    %v1105 = vadd.f32 %v899, %v1104
    %v1106 = vpop.f32.mrb[0].mxu0
    %v1107 = vadd.f32 %v903, %v1106
    %1108 = vdwg.mxu0
    %v1109 = vmax.f32 %v1101, 0.0
    %v1110 = vmax.f32 %v1103, 0.0
    %v1111 = vmax.f32 %v1105, 0.0
    %v1112 = vmax.f32 %v1107, 0.0
    %v1113 = vpack.c.bf16 %v1111, %v1109
    %v1114 = vpack.c.bf16 %v1112, %v1110
    %v1115 = vld [vmem:[#allocation10] sm:$0xf]
    %v1116 = vld [vmem:[#allocation10 + $0x4] sm:$0xf]
    %v1117 = vld [vmem:[#allocation10 + $0x8] sm:$0xf]
    %v1118 = vld [vmem:[#allocation10 + $0xc] sm:$0xf]
    %v1119 = vld [vmem:[#allocation10 + $0x10] sm:$0xf]
    %v1120 = vld [vmem:[#allocation10 + $0x14] sm:$0xf]
    %v1121 = vld [vmem:[#allocation10 + $0x18] sm:$0xf]
    %v1122 = vld [vmem:[#allocation10 + $0x1c] sm:$0xf]
    %v1123 = vld [vmem:[#allocation10 + $0x20] sm:$0xf]
    %v1124 = vld [vmem:[#allocation10 + $0x24] sm:$0xf]
    %v1125 = vld [vmem:[#allocation10 + $0x28] sm:$0xf]
    %v1126 = vld [vmem:[#allocation10 + $0x2c] sm:$0xf]
    %v1127 = vld [vmem:[#allocation10 + $0x30] sm:$0xf]
    %v1128 = vld [vmem:[#allocation10 + $0x34] sm:$0xf]
    %v1129 = vld [vmem:[#allocation10 + $0x38] sm:$0xf]
    %v1130 = vld [vmem:[#allocation10 + $0x3c] sm:$0xf]
    %v1131 = vld [vmem:[#allocation10 + $0x40] sm:$0xf]
    %v1132 = vld [vmem:[#allocation10 + $0x44] sm:$0xf]
    %v1133 = vld [vmem:[#allocation10 + $0x48] sm:$0xf]
    %v1134 = vld [vmem:[#allocation10 + $0x4c] sm:$0xf]
    %v1135 = vld [vmem:[#allocation10 + $0x50] sm:$0xf]
    %v1136 = vld [vmem:[#allocation10 + $0x54] sm:$0xf]
    %v1137 = vld [vmem:[#allocation10 + $0x58] sm:$0xf]
    %v1138 = vld [vmem:[#allocation10 + $0x5c] sm:$0xf]
    %v1139 = vld [vmem:[#allocation10 + $0x60] sm:$0xf]
    %v1140 = vld [vmem:[#allocation10 + $0x64] sm:$0xf]
    %v1141 = vld [vmem:[#allocation10 + $0x68] sm:$0xf]
    %v1142 = vld [vmem:[#allocation10 + $0x6c] sm:$0xf]
    %v1143 = vld [vmem:[#allocation10 + $0x70] sm:$0xf]
    %v1144 = vld [vmem:[#allocation10 + $0x74] sm:$0xf]
    %v1145 = vld [vmem:[#allocation10 + $0x78] sm:$0xf]
    %v1146 = vld [vmem:[#allocation10 + $0x7c] sm:$0xf]
    %v1147 = vld [vmem:[%s5 + $0x5] ss:$0 sm:$0xff]
    %v1180 = vunpack.c.l.b16 %v1115
    %v1181 = vunpack.c.l.b16 %v1116
    %v1182 = vunpack.c.l.b16 %v1117
    %v1183 = vunpack.c.l.b16 %v1118
    %v1184 = vunpack.c.l.b16 %v1119
    %v1185 = vunpack.c.l.b16 %v1120
    %v1186 = vunpack.c.l.b16 %v1121
    %v1187 = vunpack.c.l.b16 %v1122
    %v1188 = vunpack.c.l.b16 %v1123
    %v1189 = vunpack.c.l.b16 %v1124
    %v1190 = vunpack.c.l.b16 %v1125
    %v1191 = vunpack.c.l.b16 %v1126
    %v1192 = vunpack.c.l.b16 %v1127
    %v1193 = vunpack.c.l.b16 %v1128
    %v1194 = vunpack.c.l.b16 %v1129
    %v1195 = vunpack.c.l.b16 %v1130
    %v1196 = vunpack.c.l.b16 %v1131
    %v1197 = vunpack.c.l.b16 %v1132
    %v1198 = vunpack.c.l.b16 %v1133
    %v1199 = vunpack.c.l.b16 %v1134
    %v1200 = vunpack.c.l.b16 %v1135
    %v1201 = vunpack.c.l.b16 %v1136
    %v1202 = vunpack.c.l.b16 %v1137
    %v1203 = vunpack.c.l.b16 %v1138
    %v1204 = vunpack.c.l.b16 %v1139
    %v1205 = vunpack.c.l.b16 %v1140
    %v1206 = vunpack.c.l.b16 %v1141
    %v1207 = vunpack.c.l.b16 %v1142
    %v1208 = vunpack.c.l.b16 %v1143
    %v1209 = vunpack.c.l.b16 %v1144
    %v1210 = vunpack.c.l.b16 %v1145
    %v1211 = vunpack.c.l.b16 %v1146
    %v1212 = vpack.c.b16 %v1181, %v1180
    %v1213 = vpack.c.b16 %v1183, %v1182
    %v1214 = vpack.c.b16 %v1185, %v1184
    %v1215 = vpack.c.b16 %v1187, %v1186
    %v1216 = vpack.c.b16 %v1189, %v1188
    %v1217 = vpack.c.b16 %v1191, %v1190
    %v1218 = vpack.c.b16 %v1193, %v1192
    %v1219 = vpack.c.b16 %v1195, %v1194
    %v1220 = vpack.c.b16 %v1197, %v1196
    %v1221 = vpack.c.b16 %v1199, %v1198
    %v1222 = vpack.c.b16 %v1201, %v1200
    %v1223 = vpack.c.b16 %v1203, %v1202
    %v1224 = vpack.c.b16 %v1205, %v1204
    %v1225 = vpack.c.b16 %v1207, %v1206
    %v1226 = vpack.c.b16 %v1209, %v1208
    %v1227 = vpack.c.b16 %v1211, %v1210
    %1244 = vmatprep.subr.bf16.mxu0 0
    %1245 = vmatpush1.bf16.msra.mxu0 %v1212
    %1246 = vmatprep.subr.bf16.mxu0 0
    %1247 = vmatpush1.bf16.msra.mxu0 %v1213
    %1248 = vmatprep.subr.bf16.mxu0 0
    %1249 = vmatpush1.bf16.msra.mxu0 %v1214
    %1250 = vmatprep.subr.bf16.mxu0 0
    %1251 = vmatpush1.bf16.msra.mxu0 %v1215
    %1252 = vmatprep.subr.bf16.mxu0 0
    %1253 = vmatpush1.bf16.msra.mxu0 %v1216
    %1254 = vmatprep.subr.bf16.mxu0 0
    %1255 = vmatpush1.bf16.msra.mxu0 %v1217
    %1256 = vmatprep.subr.bf16.mxu0 0
    %1257 = vmatpush1.bf16.msra.mxu0 %v1218
    %1258 = vmatprep.subr.bf16.mxu0 0
    %1259 = vmatpush1.bf16.msra.mxu0 %v1219
    %1260 = vmatprep.subr.bf16.mxu0 0
    %1261 = vmatpush1.bf16.msra.mxu0 %v1220
    %1262 = vmatprep.subr.bf16.mxu0 0
    %1263 = vmatpush1.bf16.msra.mxu0 %v1221
    %1264 = vmatprep.subr.bf16.mxu0 0
    %1265 = vmatpush1.bf16.msra.mxu0 %v1222
    %1266 = vmatprep.subr.bf16.mxu0 0
    %1267 = vmatpush1.bf16.msra.mxu0 %v1223
    %1268 = vmatprep.subr.bf16.mxu0 0
    %1269 = vmatpush1.bf16.msra.mxu0 %v1224
    %1270 = vmatprep.subr.bf16.mxu0 0
    %1271 = vmatpush1.bf16.msra.mxu0 %v1225
    %1272 = vmatprep.subr.bf16.mxu0 0
    %1273 = vmatpush1.bf16.msra.mxu0 %v1226
    %1274 = vmatprep.subr.bf16.mxu0 0
    %1275 = vmatpush1.bf16.msra.mxu0 %v1227
    %1276 = vmatprep.mubr.bf16.mxu0 %v1114
    %1277 = vmatmul.mubr.bf16.gmra.mrb[0].mxu0 %v1113
    %v1278 = vpop.f32.mrb[0].mxu0
    %v1279 = vadd.f32 %v1147, %v1278
    %v1280 = vpop.f32.mrb[0].mxu0
    %v1281 = vpop.f32.mrb[0].mxu0
    %v1282 = vadd.f32 %v1147, %v1281
    %v1283 = vpop.f32.mrb[0].mxu0
    %1284 = vdwg.mxu0
    %1285 = vmax.xlane.f32.xlu0 %v1279
    %v1286 = vpop.xlane.xlu0 %1285
    %1287 = vmax.xlane.f32.xlu0 %v1282
    %v1288 = vpop.xlane.xlu0 %1287
    %v1289 = vsub.f32 %v1279, %v1286
    %v1290 = vsub.f32 %v1282, %v1288
    %v1291 = vmul.f32 %v1289, 1.442695
    %v1292 = vpow.pop %v1291
    %v1293 = vmul.f32 %v1290, 1.442695
    %v1294 = vpow.pop %v1293
    %1295 = vadd.xlane.f32.xlu0 %v1292
    %v1296 = vpop.xlane.xlu0 %1295
    %1297 = vadd.xlane.f32.xlu0 %v1294
    %v1298 = vpop.xlane.xlu0 %1297
    %v1299 = vlog2.pop %v1296
    %v1300 = vmul.f32 %v1299, 0.6931472
    %v1301 = vlog2.pop %v1298
    %v1302 = vmul.f32 %v1301, 0.6931472
    %v1303 = vsub.f32 %v1289, %v1300
    %v1304 = vsub.f32 %v1290, %v1302
    %1305 = vst [vmem:[#allocation11] sm:$0xff] %v1303
    %1306 = vst [vmem:[#allocation11 + $0x8] sm:$0xff] %v1304
    // Predicated region
    $region46: #{tpu_custom_call.1} parent=1 // pred_check
      _
    $region47: #{tpu_custom_call.1} parent=1 // pred_check_branch
      %1308 = sbr.rel (0) target = $region49
    $region48: #{tpu_custom_call.1} parent=1 // pred_region
      %s1310 = ssub.s32 256, 256
      %1311 = vsyncadd [#allocation4], %s1310
      %s1312 = sshll.u32 [#allocation11], 4
      %s1313 = int_to_ptr.vmem [resolvable:$true] %s1312
      %1318 = dma.vmem_to_hbm [thread:$0]  %s1313, 256, %s6, [#allocation4], 128, 128, 8
    $region49: #{tpu_custom_call.1} parent=1 // pred_fallthru
      _
    // Predicated region
    $region50: #{tpu_custom_call.1} parent=1 // pred_check
      _
    $region51: #{tpu_custom_call.1} parent=1 // pred_check_branch
      %1320 = sbr.rel (0) target = $region53
    $region52: #{tpu_custom_call.1} parent=1 // pred_region
      %1321 = dma.done [#allocation4], 256
    $region53: #{tpu_custom_call.1} parent=1 // pred_fallthru
      _
    %1322 = vsyncpa [#allocation3], 1
    %1323 = vsyncpa [#allocation6], 1
    %1324 = vsyncpa [#allocation9], 1
    %1325 = vsyncpa [#allocation4], 1

</llo_original>
